<compile_context>
chip_gen: v5e
topology: v5e:2x2
jax: 0.10.0
libtpu: 0.0.40
codegen_flags: <defaults>
</compile_context>

<pallas_src>
import numpy as np
import jax
import jax.numpy as jnp
from jax.experimental import pallas as pl
from jax.experimental.pallas import tpu as pltpu

NORM_PPF_0_75 = 0.6745
_LANE = 512                      # lane-dense last dim (multiple of 128)
_TARGET_BLOCK_BYTES = 1 << 20    # ~1 MiB per block


def make_levels_thrs(nbit, num_filters=1):
    """Deterministic init mirroring WeightQuantizer.__init__ (all filters share one row)."""
    n = num_filters * 3 * 3 if num_filters > 1 else 2
    base = NORM_PPF_0_75 * (2.0 / n) ** 0.5 / 2 ** (nbit - 1)
    basis = np.array([2.0 ** j * base for j in range(nbit)], dtype=np.float32)  # (nbit,)

    num_levels = 2 ** nbit
    level_multiplier = np.zeros((num_levels, nbit), dtype=np.float32)
    for i in range(num_levels):
        level_number = i
        for j in range(nbit):
            binary_code = level_number % 2
            level_multiplier[i, j] = -1.0 if binary_code == 0 else 1.0
            level_number //= 2

    levels = level_multiplier @ basis              # (num_levels,)
    levels = np.sort(levels)                       # torch.topk(largest=False) -> ascending
    thrs = 0.5 * (levels[:-1] + levels[1:])        # thrs_multiplier @ levels
    return levels.astype(np.float32), thrs.astype(np.float32)


def _make_kernel(levels, thrs):
    """Kernel with levels/thrs baked as immediates. Elementwise VPU-only."""
    num_levels = int(levels.shape[0])
    lvl = [float(v) for v in levels]
    thr = [float(v) for v in thrs]

    if num_levels <= 8:  # nbit <= 3: bit-exact unrolled threshold chain (few selects)
        def kernel(x_ref, o_ref):
            x = x_ref[...].astype(jnp.float32)     # in-register upcast (native-dtype HBM I/O)
            y = jnp.full_like(x, lvl[0])
            for i in range(num_levels - 1):        # small static unroll on the VPU
                y = jnp.where(x >= thr[i], lvl[i + 1], y)
            o_ref[...] = y.astype(o_ref.dtype)
    else:                # nbit >= 4: closed-form uniform quantizer (levels are uniform by construction)
        l0 = lvl[0]
        step = lvl[1] - lvl[0]
        inv_step = 1.0 / step
        kmax = float(num_levels - 1)

        def kernel(x_ref, o_ref):
            x = x_ref[...].astype(jnp.float32)
            k = jnp.clip(jnp.floor((x - l0) * inv_step + 0.5), 0.0, kmax)
            o_ref[...] = (l0 + step * k).astype(o_ref.dtype)

    return kernel


def make_weight_quantizer(nbit, num_filters=1):
    """Returns a jitted forward(x) reproducing WeightQuantizer(nbit, num_filters).forward."""
    if nbit == 0:
        return jax.jit(lambda x: x)

    levels, thrs = make_levels_thrs(nbit, num_filters)
    kernel = _make_kernel(levels, thrs)

    @jax.jit
    def forward(x):
        orig_shape = x.shape
        n = int(np.prod(orig_shape))
        itemsize = x.dtype.itemsize
        sub = max(8, 32 // itemsize)               # sublane multiple: 8 f32, 16 bf16, 32 int8

        flat = x.reshape(-1)                       # free under jit (contiguous)
        pad = (-n) % _LANE
        if pad:                                    # only materialize a pad copy when needed
            flat = jnp.pad(flat, (0, pad))
        rows = (n + pad) // _LANE

        # ~1 MiB blocks; double-buffered in+out ~4*block bytes -> fits default scoped VMEM
        # on every generation (v7x included), so no vmem_limit override is needed.
        target_rows = max(sub, (_TARGET_BLOCK_BYTES // (_LANE * itemsize)) // sub * sub)
        if rows <= target_rows:
            tile_r, grid_r = rows, 1               # single block; full-dim exempt from /8 rule
        else:
            tile_r, grid_r = target_rows, pl.cdiv(rows, target_rows)  # partial last block OK

        x2d = flat.reshape(rows, _LANE)
        out2d = pl.pallas_call(
            kernel,
            out_shape=jax.ShapeDtypeStruct((rows, _LANE), x.dtype),
            grid=(grid_r,),
            in_specs=[pl.BlockSpec((tile_r, _LANE), lambda i: (i, 0))],
            out_specs=pl.BlockSpec((tile_r, _LANE), lambda i: (i, 0)),
            compiler_params=pltpu.CompilerParams(
                dimension_semantics=("parallel",)),   # shards steps across v7x's 2 TCs
        )(x2d)

        # Forward value of `y + x - x.detach()` / `y + clamp(x) - clamp(x).detach()` is exactly y.
        # TODO(synk): the `training and method=='QEM'` branch only appends new_basis to
        # self.record (host-side side effect) and never changes the output; not implemented.
        if pad:
            return out2d.reshape(-1)[:n].reshape(orig_shape)
        return out2d.reshape(orig_shape)

    return forward


def _reference(x, levels, thrs):
    """Pure-JAX mirror of the PyTorch threshold-chain forward."""
    xf = x.reshape(-1).astype(jnp.float32)
    y = jnp.full_like(xf, float(levels[0]))
    for i in range(levels.shape[0] - 1):
        y = jnp.where(xf >= float(thrs[i]), float(levels[i + 1]), y)
    return y.reshape(x.shape).astype(x.dtype)


if __name__ == "__main__":
    key = jax.random.PRNGKey(0)
    x = jax.random.normal(key, (2, 4, 16, 16), dtype=jnp.float32)  # (num_filters, C, H, W)
    num_filters = x.shape[0]

    # nbit=2: threshold-chain path, bit-exact vs reference.
    quant2 = make_weight_quantizer(2, num_filters)
    lev2, thr2 = make_levels_thrs(2, num_filters)
    y2 = jax.block_until_ready(quant2(x))
    np.testing.assert_allclose(np.asarray(y2), np.asarray(_reference(x, lev2, thr2)),
                               rtol=0, atol=0)

    # Native bf16 I/O path (cast happens in-register inside the kernel).
    xb = x.astype(jnp.bfloat16)
    yb = jax.block_until_ready(quant2(xb))
    np.testing.assert_allclose(np.asarray(yb.astype(jnp.float32)),
                               np.asarray(_reference(xb, lev2, thr2).astype(jnp.float32)),
                               rtol=0, atol=0)

    # nbit=4: closed-form uniform-quantizer path; allow at most one quantization step of
    # slack vs the chain reference (floating-point tie behaviour exactly at midpoints).
    quant4 = make_weight_quantizer(4, num_filters)
    lev4, thr4 = make_levels_thrs(4, num_filters)
    y4 = jax.block_until_ready(quant4(x))
    step4 = float(lev4[1] - lev4[0])
    np.testing.assert_allclose(np.asarray(y4), np.asarray(_reference(x, lev4, thr4)),
                               rtol=0, atol=1.001 * step4)

    print("KERNEL_OK")
</pallas_src>

<mosaic_0001>
module attributes {stable_mosaic.version = 11 : i64} {
  func.func @kernel(%arg0: i32, %arg1: memref<4x512xf32, #tpu.memory_space<vmem>>, %arg2: memref<4x512xf32, #tpu.memory_space<vmem>>) attributes {dimension_semantics = [#tpu.dimension_semantics<parallel>], iteration_bounds = array<i64: 1>, scalar_prefetch = 0 : i64, scratch_operands = 0 : i64, tpu.core_type = #tpu.core_type<tc>, window_params = [{transform_indices = @transform_0, window_bounds = array<i64: 4, 512>}, {transform_indices = @transform_1, window_bounds = array<i64: 4, 512>}]} {
    %c0 = arith.constant 0 : index
    %c0_0 = arith.constant 0 : index
    %0 = vector.load %arg1[%c0, %c0_0] : memref<4x512xf32, #tpu.memory_space<vmem>>, vector<4x512xf32>
    %cst = arith.constant -3.372500e-01 : f32
    %1 = vector.broadcast %cst : f32 to vector<4x512xf32>
    %cst_1 = arith.constant -0.224833339 : f32
    %2 = vector.broadcast %cst_1 : f32 to vector<4x512xf32>
    %3 = arith.cmpf oge, %0, %2 : vector<4x512xf32>
    %cst_2 = arith.constant -0.11241667 : f32
    %4 = vector.broadcast %cst_2 : f32 to vector<4x512xf32>
    %5 = arith.select %3, %4, %1 : vector<4x512xi1>, vector<4x512xf32>
    %cst_3 = arith.constant 0.000000e+00 : f32
    %6 = vector.broadcast %cst_3 : f32 to vector<4x512xf32>
    %7 = arith.cmpf oge, %0, %6 : vector<4x512xf32>
    %cst_4 = arith.constant 0.11241667 : f32
    %8 = vector.broadcast %cst_4 : f32 to vector<4x512xf32>
    %9 = arith.select %7, %8, %5 : vector<4x512xi1>, vector<4x512xf32>
    %cst_5 = arith.constant 0.224833339 : f32
    %10 = vector.broadcast %cst_5 : f32 to vector<4x512xf32>
    %11 = arith.cmpf oge, %0, %10 : vector<4x512xf32>
    %cst_6 = arith.constant 3.372500e-01 : f32
    %12 = vector.broadcast %cst_6 : f32 to vector<4x512xf32>
    %13 = arith.select %11, %12, %9 : vector<4x512xi1>, vector<4x512xf32>
    %c0_7 = arith.constant 0 : index
    %c0_8 = arith.constant 0 : index
    %14 = vector.load %arg2[%c0_7, %c0_8] : memref<4x512xf32, #tpu.memory_space<vmem>>, vector<4x512xf32>
    tpu.vector_store %arg2[%c0_7, %c0_8], %13 {strides = array<i32>} : memref<4x512xf32, #tpu.memory_space<vmem>>, vector<4x512xf32>,
    return
  }
  func.func @transform_0(%arg0: i32) -> (i32, i32) {
    %c0_i32 = arith.constant 0 : i32
    %c0_i32_0 = arith.constant 0 : i32
    return %arg0, %c0_i32 : i32, i32
  }
  func.func @transform_1(%arg0: i32) -> (i32, i32) {
    %c0_i32 = arith.constant 0 : i32
    %c0_i32_0 = arith.constant 0 : i32
    return %arg0, %c0_i32 : i32, i32
  }
}

</mosaic_0001>

<llo_original>
// kernel: forward.1
$region0: #{forward.1}
  #allocation0 [shape = 'u32[]', space=smem, size = 0x4, offset = 0x4, fixed_abs, tag = 'smem constant byte address 0x4 - core index']
  #allocation1 [shape = 'u32[72,128]{1,0:T(1,128)}', space=vmem, size = 0x9000, scoped, tag = 'internal scratch']
  %s0 = inlined_call_operand.vmem [shape: f32[4,512], index: 0, kind: input, shape index: {}]
  %s1 = inlined_call_operand.vmem [shape: f32[4,512], index: 1, kind: output, shape index: {}]
  %s2 = sld [smem:[#allocation0]]
  $region14: #{forward.1} parent=0
    _
  %s4 = ssub.s32 1, %s2
  %s5 = scalar_select 0, %s4, %s2
  // Predicated region
  $region2: #{forward.1} parent=0 // pred_check
    _
  $region3: #{forward.1} parent=0 // pred_check_branch
    %7 = sbr.rel (0) target = $region5
  $region4: #{forward.1} parent=0 // pred_region
    _
  $region5: #{forward.1} parent=0 // pred_fallthru
    _
  %v8 = vld [vmem:[%s0] sm:$0xff]
  %v9 = vld [vmem:[%s0 + $0x8] sm:$0xff]
  %vm10 = vcmp.ge.f32.partialorder %v8, -0.22483334
  %vm11 = vcmp.ge.f32.partialorder %v9, -0.22483334
  %v12 = vsel %vm10, -0.11241667, -0.33725
  %v13 = vsel %vm11, -0.11241667, -0.33725
  %vm14 = vcmp.ge.f32.partialorder %v8, 0.0
  %vm15 = vcmp.ge.f32.partialorder %v9, 0.0
  %v16 = vsel %vm14, 0.11241667, %v12
  %v17 = vsel %vm15, 0.11241667, %v13
  %vm18 = vcmp.ge.f32.partialorder %v8, 0.22483334
  %vm19 = vcmp.ge.f32.partialorder %v9, 0.22483334
  %v20 = vsel %vm18, 0.33725, %v16
  %v21 = vsel %vm19, 0.33725, %v17
  %22 = vst [vmem:[%s1] sm:$0xff] %v20
  %23 = vst [vmem:[%s1 + $0x8] sm:$0xff] %v21
  // Predicated region
  $region6: #{forward.1} parent=0 // pred_check
    _
  $region7: #{forward.1} parent=0 // pred_check_branch
    %25 = sbr.rel (0) target = $region9
  $region8: #{forward.1} parent=0 // pred_region
    _
  $region9: #{forward.1} parent=0 // pred_fallthru
    _
  // Predicated region
  $region10: #{forward.1} parent=0 // pred_check
    _
  $region11: #{forward.1} parent=0 // pred_check_branch
    %27 = sbr.rel (0) target = $region13
  $region12: #{forward.1} parent=0 // pred_region
    _
  $region13: #{forward.1} parent=0 // pred_fallthru
    _

</llo_original>
